<compile_context>
chip_gen: v6e
topology: v6e:2x2x1
jax: 0.10.0
libtpu: 0.0.40
codegen_flags: <defaults>
</compile_context>

<pallas_src>
import jax
import jax.numpy as jnp
from jax.experimental import pallas as pl
from jax.experimental.pallas import tpu as pltpu

HIDDEN = 32   # hidden_size of the module
BATCH = 64    # hard-coded by the module: input.view(1, 64, hidden_size)
N_LAYERS = 1  # module default


def bigru_cell_kernel(x_ref, h_ref, w_ref, b_ref, out_ref):
    """One fused bidirectional GRU step (seq_len == 1).

    x_ref  : (B, H)     input at t=0
    h_ref  : (B, 2H)    hidden state [h_fwd | h_bwd]   (aliased with out_ref)
    w_ref  : (3H, 8H)   combined [x | h_fwd | h_bwd] -> gate projection,
                        gate-type-grouped columns:
                          [0:2H)  r (fwd,bwd)   [2H:4H) z (fwd,bwd)
                          [4H:6H) n input part  [6H:8H) n hidden part
    b_ref  : (1, 8H)    packed biases (r/z: b_ih+b_hh; n-in: b_ih_n; n-hid: b_hh_n)
    out_ref: (B, 2H)    new hidden == GRU output at t=0, [h_fwd' | h_bwd']
    """
    H = x_ref.shape[1]
    h = h_ref[...]                                     # (B, 2H) — read before any store (aliased)
    u = jnp.concatenate([x_ref[...], h], axis=-1)      # (B, 3H)

    # Single MXU push for both directions and all gates.
    g = jnp.dot(u, w_ref[...],
                preferred_element_type=jnp.float32) + b_ref[...]   # (B, 8H)

    rz = jax.nn.sigmoid(g[:, :4 * H])                  # one lane-dense (B, 128) sigmoid slab
    r = rz[:, :2 * H]                                  # (B, 2H)
    z = rz[:, 2 * H:]                                  # (B, 2H)
    n = jnp.tanh(g[:, 4 * H:6 * H] + r * g[:, 6 * H:])  # (B, 2H), one tanh slab
    out_ref[...] = (1.0 - z) * n + z * h


def prepare_gru_params(w_ih, w_hh, b_ih, b_hh):
    """One-time repack of PyTorch GRU params (NOT on the per-call hot path).

    w_ih, w_hh : (2, 3H, H)  weight_ih_l0 / _reverse, weight_hh_l0 / _reverse
    b_ih, b_hh : (2, 3H)

    Builds one (3H, 8H) block weight acting on [x | h_fwd | h_bwd] and one
    (1, 8H) bias, gate-type-grouped (see kernel docstring).  r/z biases are
    pre-summed; the n-gate hidden bias stays separate (inside the r* term).
    """
    H = w_ih.shape[-1]
    dt = w_ih.dtype
    zeros = jnp.zeros((H, H), dt)

    def wi(d, g):   # x -> gate columns (H, H) for direction d, gate g (0=r,1=z,2=n)
        return w_ih[d, g * H:(g + 1) * H, :].T

    def wh(d, g):   # h_d -> gate columns (H, H)
        return w_hh[d, g * H:(g + 1) * H, :].T

    def bi(d, g):
        return b_ih[d, g * H:(g + 1) * H]

    def bh(d, g):
        return b_hh[d, g * H:(g + 1) * H]

    cols, bias = [], []
    # r and z gates: input + hidden contributions summed by the single dot,
    # biases pre-folded.  Rows: [x | h_fwd | h_bwd].
    for g in (0, 1):
        for d in (0, 1):
            cols.append(jnp.concatenate(
                [wi(d, g),
                 wh(d, g) if d == 0 else zeros,
                 wh(d, g) if d == 1 else zeros], axis=0))          # (3H, H)
            bias.append(bi(d, g) + bh(d, g))
    # n gate, input contribution.
    for d in (0, 1):
        cols.append(jnp.concatenate([wi(d, 2), zeros, zeros], axis=0))
        bias.append(bi(d, 2))
    # n gate, hidden contribution (kept separate: multiplied by r in-kernel).
    for d in (0, 1):
        cols.append(jnp.concatenate(
            [zeros,
             wh(d, 2) if d == 0 else zeros,
             wh(d, 2) if d == 1 else zeros], axis=0))
        bias.append(bh(d, 2))

    w_cat = jnp.concatenate(cols, axis=1)        # (3H, 8H)
    b_cat = jnp.concatenate(bias)[None, :]       # (1, 8H)
    return {"w": w_cat, "b": b_cat}


def bigru_step(x, h, prep):
    """Single bidirectional GRU layer on a length-1 sequence.

    x : (B, H);  h : (B, 2H) = [h_fwd | h_bwd]
    returns new hidden / output values as (B, 2H), written in place over h.
    """
    B, H = x.shape
    vmem = pl.BlockSpec(memory_space=pltpu.MemorySpace.VMEM)
    return pl.pallas_call(
        bigru_cell_kernel,
        out_shape=jax.ShapeDtypeStruct((B, 2 * H), jnp.float32),
        in_specs=[vmem, vmem, vmem, vmem],
        out_specs=vmem,
        input_output_aliases={1: 0},   # new hidden overwrites the old hidden buffer
    )(x, h, prep["w"], prep["b"])


def rnn_encoder_forward(inp, hidden, prep):
    """Mirror of rnn_encoder.forward: view to (1, 64, H), run the BiGRU.

    inp    : anything that views to (1, 64, H)
    hidden : (2, B, H)  PyTorch layout (dim0 = direction)
    returns (output (1, B, 2H), hidden (2, B, H)) in PyTorch layouts.
    Layout conversions happen only at this external boundary.
    """
    x = inp.reshape(1, BATCH, HIDDEN)[0]                        # (B, H) — seq_len == 1
    h = jnp.concatenate([hidden[0], hidden[1]], axis=-1)        # (B, 2H)
    for _ in range(N_LAYERS):                                   # n_layers == 1 in the module
        h = bigru_step(x, h, prep)
    output = h[None]                                            # (1, B, 2H)
    hidden_out = jnp.stack([h[:, :HIDDEN], h[:, HIDDEN:]], 0)   # (2, B, H)
    return output, hidden_out


def init_hidden():
    return jnp.zeros((2, BATCH, HIDDEN), jnp.float32)


def _reference(x, h0, p):
    """Pure-JAX reference of the bidirectional GRU cell (PyTorch semantics)."""
    H = HIDDEN
    outs = []
    for d in range(2):
        gi = x @ p["w_ih"][d].T + p["b_ih"][d]
        gh = h0[d] @ p["w_hh"][d].T + p["b_hh"][d]
        r = jax.nn.sigmoid(gi[:, :H] + gh[:, :H])
        z = jax.nn.sigmoid(gi[:, H:2 * H] + gh[:, H:2 * H])
        n = jnp.tanh(gi[:, 2 * H:] + r * gh[:, 2 * H:])
        outs.append((1.0 - z) * n + z * h0[d])
    h_new = jnp.stack(outs, axis=0)
    out = jnp.concatenate([h_new[0], h_new[1]], axis=-1)[None]
    return out, h_new


if __name__ == "__main__":
    key = jax.random.PRNGKey(0)
    k_x, k_h, k1, k2, k3, k4 = jax.random.split(key, 6)

    # Deterministic parameter init (shapes from nn.GRU(H, H, bidirectional=True)).
    scale = 1.0 / jnp.sqrt(jnp.float32(HIDDEN))
    params = {
        "w_ih": jax.random.uniform(k1, (2, 3 * HIDDEN, HIDDEN), jnp.float32, -scale, scale),
        "w_hh": jax.random.uniform(k2, (2, 3 * HIDDEN, HIDDEN), jnp.float32, -scale, scale),
        "b_ih": jax.random.uniform(k3, (2, 3 * HIDDEN), jnp.float32, -scale, scale),
        "b_hh": jax.random.uniform(k4, (2, 3 * HIDDEN), jnp.float32, -scale, scale),
    }

    # Input: anything that views to (1, 64, HIDDEN); use (1, 64, HIDDEN) directly.
    inp = jax.random.normal(k_x, (1, BATCH, HIDDEN), jnp.float32)

    # One-time parameter repack, then the jitted Pallas forward.
    prep = prepare_gru_params(params["w_ih"], params["w_hh"],
                              params["b_ih"], params["b_hh"])
    fwd = jax.jit(rnn_encoder_forward)

    # Check both the module's zero initHidden and a non-zero hidden state
    # (the latter exercises the block-diagonal hidden->gates packing).
    hidden_zero = init_hidden()
    hidden_rand = jax.random.normal(k_h, (2, BATCH, HIDDEN), jnp.float32)

    for h_in in (hidden_zero, hidden_rand):
        output, hidden = fwd(inp, h_in, prep)
        jax.block_until_ready((output, hidden))
        ref_out, ref_hid = _reference(inp[0], h_in, params)

        assert output.shape == (1, BATCH, 2 * HIDDEN)
        assert hidden.shape == (2, BATCH, HIDDEN)
        assert jnp.allclose(output, ref_out, atol=1e-5, rtol=1e-5)
        assert jnp.allclose(hidden, ref_hid, atol=1e-5, rtol=1e-5)

    print("KERNEL_OK")
</pallas_src>

<mosaic_0001>
module attributes {stable_mosaic.version = 11 : i64} {
  func.func @bigru_cell_kernel(%arg0: memref<64x32xf32, #tpu.memory_space<vmem>>, %arg1: memref<64x64xf32, #tpu.memory_space<vmem>>, %arg2: memref<96x256xf32, #tpu.memory_space<vmem>>, %arg3: memref<1x256xf32, #tpu.memory_space<vmem>>, %arg4: memref<64x64xf32, #tpu.memory_space<vmem>>) attributes {dimension_semantics = [], scalar_prefetch = 0 : i64, scratch_operands = 0 : i64, tpu.core_type = #tpu.core_type<tc>} {
    %c0 = arith.constant 0 : index
    %c0_0 = arith.constant 0 : index
    %0 = vector.load %arg1[%c0, %c0_0] : memref<64x64xf32, #tpu.memory_space<vmem>>, vector<64x64xf32>
    %c0_1 = arith.constant 0 : index
    %c0_2 = arith.constant 0 : index
    %1 = vector.load %arg0[%c0_1, %c0_2] : memref<64x32xf32, #tpu.memory_space<vmem>>, vector<64x32xf32>
    %2 = tpu.concatenate %1, %0 in 1 : vector<64x32xf32>, vector<64x64xf32> -> vector<64x96xf32>
    %c0_3 = arith.constant 0 : index
    %c0_4 = arith.constant 0 : index
    %3 = vector.load %arg2[%c0_3, %c0_4] : memref<96x256xf32, #tpu.memory_space<vmem>>, vector<96x256xf32>
    %cst = arith.constant dense<0.000000e+00> : vector<64x256xf32>
    %4 = tpu.matmul %2, %3, %cst {dimension_numbers = #tpu.dot_dimension_numbers<[1], [0], [0], [1], [0, 0, 1, 1], [], []>} : vector<64x96xf32>, vector<96x256xf32>, vector<64x256xf32> -> vector<64x256xf32>
    %c0_5 = arith.constant 0 : index
    %c0_6 = arith.constant 0 : index
    %5 = vector.load %arg3[%c0_5, %c0_6] : memref<1x256xf32, #tpu.memory_space<vmem>>, vector<1x256xf32>
    %6 = vector.broadcast %5 : vector<1x256xf32> to vector<64x256xf32>
    %7 = arith.addf %4, %6 : vector<64x256xf32>
    %8 = vector.extract_strided_slice %7 {offsets = [0, 0], sizes = [64, 128], strides = [1, 1]} : vector<64x256xf32> to vector<64x128xf32>
    %9 = arith.negf %8 : vector<64x128xf32>
    %10 = math.exp %9 : vector<64x128xf32>
    %cst_7 = arith.constant 1.000000e+00 : f32
    %11 = vector.broadcast %cst_7 : f32 to vector<64x128xf32>
    %12 = arith.addf %11, %10 : vector<64x128xf32>
    %13 = arith.divf %11, %12 : vector<64x128xf32>
    %14 = vector.extract_strided_slice %13 {offsets = [0, 0], sizes = [64, 64], strides = [1, 1]} : vector<64x128xf32> to vector<64x64xf32>
    %15 = vector.extract_strided_slice %13 {offsets = [0, 64], sizes = [64, 64], strides = [1, 1]} : vector<64x128xf32> to vector<64x64xf32>
    %16 = vector.extract_strided_slice %7 {offsets = [0, 128], sizes = [64, 64], strides = [1, 1]} : vector<64x256xf32> to vector<64x64xf32>
    %17 = vector.extract_strided_slice %7 {offsets = [0, 192], sizes = [64, 64], strides = [1, 1]} : vector<64x256xf32> to vector<64x64xf32>
    %18 = arith.mulf %14, %17 : vector<64x64xf32>
    %19 = arith.addf %16, %18 : vector<64x64xf32>
    %20 = math.tanh %19 : vector<64x64xf32>
    %cst_8 = arith.constant 1.000000e+00 : f32
    %21 = vector.broadcast %cst_8 : f32 to vector<64x64xf32>
    %22 = arith.subf %21, %15 : vector<64x64xf32>
    %23 = arith.mulf %22, %20 : vector<64x64xf32>
    %24 = arith.mulf %15, %0 : vector<64x64xf32>
    %25 = arith.addf %23, %24 : vector<64x64xf32>
    %c0_9 = arith.constant 0 : index
    %c0_10 = arith.constant 0 : index
    %26 = vector.load %arg4[%c0_9, %c0_10] : memref<64x64xf32, #tpu.memory_space<vmem>>, vector<64x64xf32>
    tpu.vector_store %arg4[%c0_9, %c0_10], %25 {strides = array<i32>} : memref<64x64xf32, #tpu.memory_space<vmem>>, vector<64x64xf32>,
    return
  }
}

</mosaic_0001>

<llo_original>
// kernel: rnn_encoder_forward.1
$region0: #{rnn_encoder_forward.1}
  #allocation0 [shape = 'u32[]', space=smem, size = 0x4, offset = 0x4, fixed_abs, tag = 'smem constant byte address 0x4 - core index']
  #allocation1 [shape = 'u32[144,128]{1,0:T(1,128)}', space=vmem, size = 0x12000, scoped, tag = 'internal scratch']
  %s0 = inlined_call_operand.vmem [shape: f32[64,32], index: 0, kind: input, shape index: {}]
  %s1 = inlined_call_operand.vmem [shape: f32[64,64], index: 1, kind: input, shape index: {}, may-alias: {1,4}]
  %s2 = inlined_call_operand.vmem [shape: f32[96,256], index: 2, kind: input, shape index: {}]
  %s3 = inlined_call_operand.vmem [shape: f32[1,256], index: 3, kind: input, shape index: {}]
  %s4 = inlined_call_operand.vmem [shape: f32[64,64], index: 4, kind: output, shape index: {}, may-alias: {1,4}]
  %s5 = sld [smem:[#allocation0]]
  $region26: #{rnn_encoder_forward.1} parent=0
    _
  %s7 = ssub.s32 1, %s5
  %s8 = scalar_select 0, %s7, %s5
  // Predicated region
  $region2: #{rnn_encoder_forward.1} parent=0 // pred_check
    _
  $region3: #{rnn_encoder_forward.1} parent=0 // pred_check_branch
    %10 = sbr.rel (0) target = $region5
  $region4: #{rnn_encoder_forward.1} parent=0 // pred_region
    _
  $region5: #{rnn_encoder_forward.1} parent=0 // pred_fallthru
    _
  // Predicated region
  $region6: #{rnn_encoder_forward.1} parent=0 // pred_check
    _
  $region7: #{rnn_encoder_forward.1} parent=0 // pred_check_branch
    %12 = sbr.rel (0) target = $region9
  $region8: #{rnn_encoder_forward.1} parent=0 // pred_region
    _
  $region9: #{rnn_encoder_forward.1} parent=0 // pred_fallthru
    _
  // Predicated region
  $region10: #{rnn_encoder_forward.1} parent=0 // pred_check
    _
  $region11: #{rnn_encoder_forward.1} parent=0 // pred_check_branch
    %14 = sbr.rel (0) target = $region13
  $region12: #{rnn_encoder_forward.1} parent=0 // pred_region
    _
  $region13: #{rnn_encoder_forward.1} parent=0 // pred_fallthru
    _
  // Predicated region
  $region14: #{rnn_encoder_forward.1} parent=0 // pred_check
    _
  $region15: #{rnn_encoder_forward.1} parent=0 // pred_check_branch
    %16 = sbr.rel (0) target = $region17
  $region16: #{rnn_encoder_forward.1} parent=0 // pred_region
    _
  $region17: #{rnn_encoder_forward.1} parent=0 // pred_fallthru
    _
  %v17 = vld [vmem:[%s1] sm:$0xff]
  %v18 = vld [vmem:[%s1 + $0x8] sm:$0xff]
  %v19 = vld [vmem:[%s1 + $0x10] sm:$0xff]
  %v20 = vld [vmem:[%s1 + $0x18] sm:$0xff]
  %v21 = vld [vmem:[%s1 + $0x20] sm:$0xff]
  %v22 = vld [vmem:[%s1 + $0x28] sm:$0xff]
  %v23 = vld [vmem:[%s1 + $0x30] sm:$0xff]
  %v24 = vld [vmem:[%s1 + $0x38] sm:$0xff]
  %v25 = vld [vmem:[%s0] sm:$0xff]
  %v26 = vld [vmem:[%s0 + $0x8] sm:$0xff]
  %v27 = vld [vmem:[%s0 + $0x10] sm:$0xff]
  %v28 = vld [vmem:[%s0 + $0x18] sm:$0xff]
  %v29 = vld [vmem:[%s0 + $0x20] sm:$0xff]
  %v30 = vld [vmem:[%s0 + $0x28] sm:$0xff]
  %v31 = vld [vmem:[%s0 + $0x30] sm:$0xff]
  %v32 = vld [vmem:[%s0 + $0x38] sm:$0xff]
  %41 = vrot.lane.b32.xlu0 %v17, 32
  %v42 = vpop.permute.xlu0 %41
  %43 = vrot.lane.b32.xlu0 %v18, 32
  %v44 = vpop.permute.xlu0 %43
  %45 = vrot.lane.b32.xlu0 %v19, 32
  %v46 = vpop.permute.xlu0 %45
  %47 = vrot.lane.b32.xlu0 %v20, 32
  %v48 = vpop.permute.xlu0 %47
  %49 = vrot.lane.b32.xlu0 %v21, 32
  %v50 = vpop.permute.xlu0 %49
  %51 = vrot.lane.b32.xlu0 %v22, 32
  %v52 = vpop.permute.xlu0 %51
  %53 = vrot.lane.b32.xlu0 %v23, 32
  %v54 = vpop.permute.xlu0 %53
  %55 = vrot.lane.b32.xlu0 %v24, 32
  %v56 = vpop.permute.xlu0 %55
  %vm65 = vcmask 261120
  %v66 = vsel %vm65, %v25, %v42
  %v67 = vsel %vm65, %v26, %v44
  %v68 = vsel %vm65, %v27, %v46
  %v69 = vsel %vm65, %v28, %v48
  %v70 = vsel %vm65, %v29, %v50
  %v71 = vsel %vm65, %v30, %v52
  %v72 = vsel %vm65, %v31, %v54
  %v73 = vsel %vm65, %v32, %v56
  %v74 = vld [vmem:[%s2] sm:$0xff]
  %v75 = vld [vmem:[%s2 + $0x8] sm:$0xff]
  %v76 = vld [vmem:[%s2 + $0x10] sm:$0xff]
  %v77 = vld [vmem:[%s2 + $0x18] sm:$0xff]
  %v78 = vld [vmem:[%s2 + $0x20] sm:$0xff]
  %v79 = vld [vmem:[%s2 + $0x28] sm:$0xff]
  %v80 = vld [vmem:[%s2 + $0x30] sm:$0xff]
  %v81 = vld [vmem:[%s2 + $0x38] sm:$0xff]
  %v82 = vld [vmem:[%s2 + $0x40] sm:$0xff]
  %v83 = vld [vmem:[%s2 + $0x48] sm:$0xff]
  %v84 = vld [vmem:[%s2 + $0x50] sm:$0xff]
  %v85 = vld [vmem:[%s2 + $0x58] sm:$0xff]
  %v86 = vld [vmem:[%s2 + $0x60] sm:$0xff]
  %v87 = vld [vmem:[%s2 + $0x68] sm:$0xff]
  %v88 = vld [vmem:[%s2 + $0x70] sm:$0xff]
  %v89 = vld [vmem:[%s2 + $0x78] sm:$0xff]
  %v90 = vld [vmem:[%s2 + $0x80] sm:$0xff]
  %v91 = vld [vmem:[%s2 + $0x88] sm:$0xff]
  %v92 = vld [vmem:[%s2 + $0x90] sm:$0xff]
  %v93 = vld [vmem:[%s2 + $0x98] sm:$0xff]
  %v94 = vld [vmem:[%s2 + $0xa0] sm:$0xff]
  %v95 = vld [vmem:[%s2 + $0xa8] sm:$0xff]
  %v96 = vld [vmem:[%s2 + $0xb0] sm:$0xff]
  %v97 = vld [vmem:[%s2 + $0xb8] sm:$0xff]
  %v98 = vld [vmem:[%s3] sm:$0x3]
  %v100 = vlaneseq
  %v101 = vshrl.u32 %v100, 7
  %v102 = vsub.s32 0, %v101
  %v103 = vrot.slane %v98, %v102
  %v104 = vlaneseq
  %v105 = vshrl.u32 %v104, 7
  %v106 = vsub.s32 1, %v105
  %v107 = vrot.slane %v98, %v106
  %vm110 = vcmask 785408
  %v112 = vsel %vm110, %v66, 0
  %v115 = vsel %vm110, %v67, 0
  %v118 = vsel %vm110, %v68, 0
  %v121 = vsel %vm110, %v69, 0
  %v124 = vsel %vm110, %v70, 0
  %v127 = vsel %vm110, %v71, 0
  %v130 = vsel %vm110, %v72, 0
  %v133 = vsel %vm110, %v73, 0
  %135 = vmatprep.subr.mxu0 0.0
  %136 = vmatpush1.msra.mxu0 0.0
  %137 = vmatprep.subr.mxu0 0.0
  %138 = vmatpush1.msra.mxu0 0.0
  %139 = vmatprep.subr.mxu0 0.0
  %140 = vmatpush1.msra.mxu0 0.0
  %141 = vmatprep.subr.mxu0 0.0
  %142 = vmatpush1.msra.mxu0 0.0
  %143 = vmatprep.subr.mxu0 %v97
  %144 = vmatpush1.msra.mxu0 %v96
  %145 = vmatprep.subr.mxu0 %v95
  %146 = vmatpush1.msra.mxu0 %v94
  %147 = vmatprep.subr.mxu0 %v93
  %148 = vmatpush1.msra.mxu0 %v92
  %149 = vmatprep.subr.mxu0 %v91
  %150 = vmatpush1.msra.mxu0 %v90
  %151 = vmatprep.subr.mxu0 %v89
  %152 = vmatpush1.msra.mxu0 %v88
  %153 = vmatprep.subr.mxu0 %v87
  %154 = vmatpush1.msra.mxu0 %v86
  %155 = vmatprep.subr.mxu0 %v85
  %156 = vmatpush1.msra.mxu0 %v84
  %157 = vmatprep.subr.mxu0 %v83
  %158 = vmatpush1.msra.mxu0 %v82
  %159 = vmatprep.subr.mxu0 %v81
  %160 = vmatpush1.msra.mxu0 %v80
  %161 = vmatprep.subr.mxu0 %v79
  %162 = vmatpush1.msra.mxu0 %v78
  %163 = vmatprep.subr.mxu0 %v77
  %164 = vmatpush1.msra.mxu0 %v76
  %165 = vmatprep.subr.mxu0 %v75
  %166 = vmatpush1.msra.mxu0 %v74
  %167 = vmatprep.subr.mxu0 0.0
  %168 = vmatpush2.msra.mxu0 0.0
  %169 = vmatprep.subr.mxu0 0.0
  %170 = vmatpush2.msra.mxu0 0.0
  %171 = vmatprep.subr.mxu0 0.0
  %172 = vmatpush2.msra.mxu0 0.0
  %173 = vmatprep.subr.mxu0 0.0
  %174 = vmatpush2.msra.mxu0 0.0
  %175 = vmatprep.subr.mxu0 0.0
  %176 = vmatpush2.msra.mxu0 0.0
  %177 = vmatprep.subr.mxu0 0.0
  %178 = vmatpush2.msra.mxu0 0.0
  %179 = vmatprep.subr.mxu0 0.0
  %180 = vmatpush2.msra.mxu0 0.0
  %181 = vmatprep.subr.mxu0 0.0
  %182 = vmatpush2.msra.mxu0 0.0
  %183 = vmatprep.subr.mxu0 0.0
  %184 = vmatpush2.msra.mxu0 0.0
  %185 = vmatprep.subr.mxu0 0.0
  %186 = vmatpush2.msra.mxu0 0.0
  %187 = vmatprep.subr.mxu0 0.0
  %188 = vmatpush2.msra.mxu0 0.0
  %189 = vmatprep.subr.mxu0 0.0
  %190 = vmatpush2.msra.mxu0 0.0
  %191 = vmatprep.subr.mxu0 0.0
  %192 = vmatpush2.msra.mxu0 0.0
  %193 = vmatprep.subr.mxu0 0.0
  %194 = vmatpush2.msra.mxu0 0.0
  %195 = vmatprep.subr.mxu0 0.0
  %196 = vmatpush2.msra.mxu0 0.0
  %197 = vmatprep.subr.mxu0 0.0
  %198 = vmatpush2.msra.mxu0 0.0
  %199 = vmatprep.mubr.f32.mxu0 0.0
  %200 = vmatmul.mubr.f32.gmra.mxu0 %v112
  %v201 = vpop.f32.mrf.mxu0
  %v202 = vadd.f32 %v103, %v201
  %v203 = vpop.f32.mrf.mxu0
  %v204 = vadd.f32 %v107, %v203
  %205 = vmatprep.mubr.f32.mxu0 0.0
  %206 = vmatmul.mubr.f32.gmra.mxu0 %v115
  %v207 = vpop.f32.mrf.mxu0
  %v208 = vadd.f32 %v103, %v207
  %v209 = vpop.f32.mrf.mxu0
  %v210 = vadd.f32 %v107, %v209
  %211 = vmatprep.mubr.f32.mxu0 0.0
  %212 = vmatmul.mubr.f32.gmra.mxu0 %v118
  %v213 = vpop.f32.mrf.mxu0
  %v214 = vadd.f32 %v103, %v213
  %v215 = vpop.f32.mrf.mxu0
  %v216 = vadd.f32 %v107, %v215
  %217 = vmatprep.mubr.f32.mxu0 0.0
  %218 = vmatmul.mubr.f32.gmra.mxu0 %v121
  %v219 = vpop.f32.mrf.mxu0
  %v220 = vadd.f32 %v103, %v219
  %v221 = vpop.f32.mrf.mxu0
  %v222 = vadd.f32 %v107, %v221
  %223 = vmatprep.mubr.f32.mxu0 0.0
  %224 = vmatmul.mubr.f32.gmra.mxu0 %v124
  %v225 = vpop.f32.mrf.mxu0
  %v226 = vadd.f32 %v103, %v225
  %v227 = vpop.f32.mrf.mxu0
  %v228 = vadd.f32 %v107, %v227
  %229 = vmatprep.mubr.f32.mxu0 0.0
  %230 = vmatmul.mubr.f32.gmra.mxu0 %v127
  %v231 = vpop.f32.mrf.mxu0
  %v232 = vadd.f32 %v103, %v231
  %v233 = vpop.f32.mrf.mxu0
  %v234 = vadd.f32 %v107, %v233
  %235 = vmatprep.mubr.f32.mxu0 0.0
  %236 = vmatmul.mubr.f32.gmra.mxu0 %v130
  %v237 = vpop.f32.mrf.mxu0
  %v238 = vadd.f32 %v103, %v237
  %v239 = vpop.f32.mrf.mxu0
  %v240 = vadd.f32 %v107, %v239
  %241 = vmatprep.mubr.f32.mxu0 0.0
  %242 = vmatmul.mubr.f32.gmra.mxu0 %v133
  %v243 = vpop.f32.mrf.mxu0
  %v244 = vadd.f32 %v103, %v243
  %v245 = vpop.f32.mrf.mxu0
  %v246 = vadd.f32 %v107, %v245
  %247 = vdwg.mxu0
  %v248 = vxor.u32 %v202, 2147483648
  %v249 = vxor.u32 %v208, 2147483648
  %v250 = vxor.u32 %v214, 2147483648
  %v251 = vxor.u32 %v220, 2147483648
  %v252 = vxor.u32 %v226, 2147483648
  %v253 = vxor.u32 %v232, 2147483648
  %v254 = vxor.u32 %v238, 2147483648
  %v255 = vxor.u32 %v244, 2147483648
  %v256 = vmul.f32 %v248, 1.442695
  %v257 = vpow.pop %v256
  %v258 = vmul.f32 %v249, 1.442695
  %v259 = vpow.pop %v258
  %v260 = vmul.f32 %v250, 1.442695
  %v261 = vpow.pop %v260
  %v262 = vmul.f32 %v251, 1.442695
  %v263 = vpow.pop %v262
  %v264 = vmul.f32 %v252, 1.442695
  %v265 = vpow.pop %v264
  %v266 = vmul.f32 %v253, 1.442695
  %v267 = vpow.pop %v266
  %v268 = vmul.f32 %v254, 1.442695
  %v269 = vpow.pop %v268
  %v270 = vmul.f32 %v255, 1.442695
  %v271 = vpow.pop %v270
  %v272 = vadd.f32 %v257, 1.0
  %v273 = vadd.f32 %v259, 1.0
  %v274 = vadd.f32 %v261, 1.0
  %v275 = vadd.f32 %v263, 1.0
  %v276 = vadd.f32 %v265, 1.0
  %v277 = vadd.f32 %v267, 1.0
  %v278 = vadd.f32 %v269, 1.0
  %v279 = vadd.f32 %v271, 1.0
  %v280 = vrcp.pop %v272
  %v281 = vmul.f32 1.0, %v280
  %v282 = vrcp.pop %v273
  %v283 = vmul.f32 1.0, %v282
  %v284 = vrcp.pop %v274
  %v285 = vmul.f32 1.0, %v284
  %v286 = vrcp.pop %v275
  %v287 = vmul.f32 1.0, %v286
  %v288 = vrcp.pop %v276
  %v289 = vmul.f32 1.0, %v288
  %v290 = vrcp.pop %v277
  %v291 = vmul.f32 1.0, %v290
  %v292 = vrcp.pop %v278
  %v293 = vmul.f32 1.0, %v292
  %v294 = vrcp.pop %v279
  %v295 = vmul.f32 1.0, %v294
  %304 = vrot.lane.b32.xlu0 %v204, 64
  %v305 = vpop.permute.xlu0 %304
  %306 = vrot.lane.b32.xlu0 %v210, 64
  %v307 = vpop.permute.xlu0 %306
  %308 = vrot.lane.b32.xlu0 %v216, 64
  %v309 = vpop.permute.xlu0 %308
  %310 = vrot.lane.b32.xlu0 %v222, 64
  %v311 = vpop.permute.xlu0 %310
  %312 = vrot.lane.b32.xlu0 %v228, 64
  %v313 = vpop.permute.xlu0 %312
  %314 = vrot.lane.b32.xlu0 %v234, 64
  %v315 = vpop.permute.xlu0 %314
  %316 = vrot.lane.b32.xlu0 %v240, 64
  %v317 = vpop.permute.xlu0 %316
  %318 = vrot.lane.b32.xlu0 %v246, 64
  %v319 = vpop.permute.xlu0 %318
  %v328 = vmul.f32 %v281, %v305
  %v329 = vmul.f32 %v283, %v307
  %v330 = vmul.f32 %v285, %v309
  %v331 = vmul.f32 %v287, %v311
  %v332 = vmul.f32 %v289, %v313
  %v333 = vmul.f32 %v291, %v315
  %v334 = vmul.f32 %v293, %v317
  %v335 = vmul.f32 %v295, %v319
  %v336 = vadd.f32 %v204, %v328
  %v337 = vadd.f32 %v210, %v329
  %v338 = vadd.f32 %v216, %v330
  %v339 = vadd.f32 %v222, %v331
  %v340 = vadd.f32 %v228, %v332
  %v341 = vadd.f32 %v234, %v333
  %v342 = vadd.f32 %v240, %v334
  %v343 = vadd.f32 %v246, %v335
  %v344 = vtanh.pop %v336
  %v345 = vtanh.pop %v337
  %v346 = vtanh.pop %v338
  %v347 = vtanh.pop %v339
  %v348 = vtanh.pop %v340
  %v349 = vtanh.pop %v341
  %v350 = vtanh.pop %v342
  %v351 = vtanh.pop %v343
  %v352 = vsub.f32 1.0, %v281
  %v353 = vsub.f32 1.0, %v283
  %v354 = vsub.f32 1.0, %v285
  %v355 = vsub.f32 1.0, %v287
  %v356 = vsub.f32 1.0, %v289
  %v357 = vsub.f32 1.0, %v291
  %v358 = vsub.f32 1.0, %v293
  %v359 = vsub.f32 1.0, %v295
  %368 = vrot.lane.b32.xlu0 %v344, 64
  %v369 = vpop.permute.xlu0 %368
  %370 = vrot.lane.b32.xlu0 %v345, 64
  %v371 = vpop.permute.xlu0 %370
  %372 = vrot.lane.b32.xlu0 %v346, 64
  %v373 = vpop.permute.xlu0 %372
  %374 = vrot.lane.b32.xlu0 %v347, 64
  %v375 = vpop.permute.xlu0 %374
  %376 = vrot.lane.b32.xlu0 %v348, 64
  %v377 = vpop.permute.xlu0 %376
  %378 = vrot.lane.b32.xlu0 %v349, 64
  %v379 = vpop.permute.xlu0 %378
  %380 = vrot.lane.b32.xlu0 %v350, 64
  %v381 = vpop.permute.xlu0 %380
  %382 = vrot.lane.b32.xlu0 %v351, 64
  %v383 = vpop.permute.xlu0 %382
  %v392 = vmul.f32 %v352, %v369
  %v393 = vmul.f32 %v353, %v371
  %v394 = vmul.f32 %v354, %v373
  %v395 = vmul.f32 %v355, %v375
  %v396 = vmul.f32 %v356, %v377
  %v397 = vmul.f32 %v357, %v379
  %v398 = vmul.f32 %v358, %v381
  %v399 = vmul.f32 %v359, %v383
  %400 = vrot.lane.b32.xlu0 %v17, 64
  %v401 = vpop.permute.xlu0 %400
  %402 = vrot.lane.b32.xlu0 %v18, 64
  %v403 = vpop.permute.xlu0 %402
  %404 = vrot.lane.b32.xlu0 %v19, 64
  %v405 = vpop.permute.xlu0 %404
  %406 = vrot.lane.b32.xlu0 %v20, 64
  %v407 = vpop.permute.xlu0 %406
  %408 = vrot.lane.b32.xlu0 %v21, 64
  %v409 = vpop.permute.xlu0 %408
  %410 = vrot.lane.b32.xlu0 %v22, 64
  %v411 = vpop.permute.xlu0 %410
  %412 = vrot.lane.b32.xlu0 %v23, 64
  %v413 = vpop.permute.xlu0 %412
  %414 = vrot.lane.b32.xlu0 %v24, 64
  %v415 = vpop.permute.xlu0 %414
  %v424 = vmul.f32 %v281, %v401
  %v425 = vmul.f32 %v283, %v403
  %v426 = vmul.f32 %v285, %v405
  %v427 = vmul.f32 %v287, %v407
  %v428 = vmul.f32 %v289, %v409
  %v429 = vmul.f32 %v291, %v411
  %v430 = vmul.f32 %v293, %v413
  %v431 = vmul.f32 %v295, %v415
  %v432 = vadd.f32 %v392, %v424
  %v433 = vadd.f32 %v393, %v425
  %v434 = vadd.f32 %v394, %v426
  %v435 = vadd.f32 %v395, %v427
  %v436 = vadd.f32 %v396, %v428
  %v437 = vadd.f32 %v397, %v429
  %v438 = vadd.f32 %v398, %v430
  %v439 = vadd.f32 %v399, %v431
  %448 = vrot.lane.b32.xlu0 %v432, 64
  %v449 = vpop.permute.xlu0 %448
  %450 = vrot.lane.b32.xlu0 %v433, 64
  %v451 = vpop.permute.xlu0 %450
  %452 = vrot.lane.b32.xlu0 %v434, 64
  %v453 = vpop.permute.xlu0 %452
  %454 = vrot.lane.b32.xlu0 %v435, 64
  %v455 = vpop.permute.xlu0 %454
  %456 = vrot.lane.b32.xlu0 %v436, 64
  %v457 = vpop.permute.xlu0 %456
  %458 = vrot.lane.b32.xlu0 %v437, 64
  %v459 = vpop.permute.xlu0 %458
  %460 = vrot.lane.b32.xlu0 %v438, 64
  %v461 = vpop.permute.xlu0 %460
  %462 = vrot.lane.b32.xlu0 %v439, 64
  %v463 = vpop.permute.xlu0 %462
  %vm472 = vcmask 523264
  %473 = vst.msk [vmem:[%s4] sm:$0xff] %vm472, %v449
  %474 = vst.msk [vmem:[%s4 + $0x8] sm:$0xff] %vm472, %v451
  %475 = vst.msk [vmem:[%s4 + $0x10] sm:$0xff] %vm472, %v453
  %476 = vst.msk [vmem:[%s4 + $0x18] sm:$0xff] %vm472, %v455
  %477 = vst.msk [vmem:[%s4 + $0x20] sm:$0xff] %vm472, %v457
  %478 = vst.msk [vmem:[%s4 + $0x28] sm:$0xff] %vm472, %v459
  %479 = vst.msk [vmem:[%s4 + $0x30] sm:$0xff] %vm472, %v461
  %480 = vst.msk [vmem:[%s4 + $0x38] sm:$0xff] %vm472, %v463
  // Predicated region
  $region18: #{rnn_encoder_forward.1} parent=0 // pred_check
    _
  $region19: #{rnn_encoder_forward.1} parent=0 // pred_check_branch
    %482 = sbr.rel (0) target = $region21
  $region20: #{rnn_encoder_forward.1} parent=0 // pred_region
    _
  $region21: #{rnn_encoder_forward.1} parent=0 // pred_fallthru
    _
  // Predicated region
  $region22: #{rnn_encoder_forward.1} parent=0 // pred_check
    _
  $region23: #{rnn_encoder_forward.1} parent=0 // pred_check_branch
    %484 = sbr.rel (0) target = $region25
  $region24: #{rnn_encoder_forward.1} parent=0 // pred_region
    _
  $region25: #{rnn_encoder_forward.1} parent=0 // pred_fallthru
    _

</llo_original>
